<compile_context>
chip_gen: v7x
topology: tpu7x:2x2x1
jax: 0.10.0
libtpu: 0.0.40
codegen_flags: <defaults>
</compile_context>

<pallas_src>
import jax
import jax.numpy as jnp
from jax.experimental import pallas as pl
from jax.experimental.pallas import tpu as pltpu

LANE = 128      # lane width (last dim)
SUBLANE = 8     # sublane width (second-to-last dim)


def _round_up(n, m):
    return ((n + m - 1) // m) * m


def _vmem_capacity_bytes():
    try:
        return int(pltpu.get_tpu_info().vmem_capacity_bytes)
    except Exception:
        return 64 * 1024 * 1024          # conservative: v7x per-TC VMEM


# ---------------------------------------------------------------------------
# Resident-weight kernel:
#   logits_tile = tanh(x_tile @ W_dense + b_dense) @ W_out + b_out
# ---------------------------------------------------------------------------
def _fused_kernel(x_ref, wd_ref, bd_ref, wo_ref, bo_ref, o_ref):
    # x_ref:(TM,H) bf16  wd_ref:(H,H) bf16  bd_ref:(1,H) f32
    # wo_ref:(H,Lp) bf16 bo_ref:(1,Lp) f32  o_ref:(TM,Lp) f32
    h = jnp.dot(x_ref[...], wd_ref[...], preferred_element_type=jnp.float32)
    h = jnp.tanh(h + bd_ref[...])                       # f32 bias-add / tanh
    logits = jnp.dot(h.astype(jnp.bfloat16), wo_ref[...],
                     preferred_element_type=jnp.float32) + bo_ref[...]
    o_ref[...] = logits.astype(o_ref.dtype)


# ---------------------------------------------------------------------------
# K-tiled kernel (weights streamed in hidden-column slabs; f32 accumulator):
#   per (i, j): acc += tanh(x_i @ Wd[:, j] + bd[j]) @ Wo[j, :]
# ---------------------------------------------------------------------------
def _ktiled_kernel(x_ref, wd_ref, bd_ref, wo_ref, bo_ref, o_ref, acc_ref):
    j = pl.program_id(1)

    @pl.when(j == 0)
    def _init():
        acc_ref[...] = jnp.zeros_like(acc_ref)

    h = jnp.dot(x_ref[...], wd_ref[...], preferred_element_type=jnp.float32)
    h = jnp.tanh(h + bd_ref[...])
    acc_ref[...] += jnp.dot(h.astype(jnp.bfloat16), wo_ref[...],
                            preferred_element_type=jnp.float32)

    @pl.when(j == pl.num_programs(1) - 1)
    def _finalize():
        o_ref[...] = (acc_ref[...] + bo_ref[...]).astype(o_ref.dtype)


# ---------------------------------------------------------------------------
# Wrapper
# ---------------------------------------------------------------------------
def classifier_head_forward(x, params, *, row_tile=512, k_tile=512,
                            force_ktiled=False):
    """Eval-mode ClassifierHead forward. x: (..., H) -> (..., num_labels)."""
    H = params["w_dense"].shape[0]
    L = params["b_out"].shape[0]
    lead = x.shape[:-1]
    n = 1
    for d in lead:
        n *= d

    # bf16 for everything the MXU consumes; f32 for biases / accumulation.
    xf = x.reshape(n, H).astype(jnp.bfloat16)
    wd = params["w_dense"].astype(jnp.bfloat16)
    wo = params["w_out"].astype(jnp.bfloat16)
    bd = params["b_dense"].reshape(1, H).astype(jnp.float32)
    bo = params["b_out"].astype(jnp.float32)

    # Row tiling (multiple of 8; default 512 to amortize per-step overhead).
    tm = min(row_tile, _round_up(n, SUBLANE))
    n_pad = _round_up(n, tm)
    if n_pad != n:
        xf = jnp.pad(xf, ((0, n_pad - n), (0, 0)))

    # Lane-dense logits: pad num_labels to a multiple of 128 (full `vst`).
    lp = _round_up(L, LANE)
    if lp != L:
        wo = jnp.pad(wo, ((0, 0), (0, lp - L)))
        bo = jnp.pad(bo, (0, lp - L))
    bo = bo.reshape(1, lp)

    cap = _vmem_capacity_bytes()
    mib = 1024 * 1024
    resident_weight_bytes = (H * H + H * lp) * 2        # bf16, single-buffered
    use_ktiled = force_ktiled or resident_weight_bytes > cap // 4

    if not use_ktiled:
        needed = (2 * tm * H * 2                 # x tile (double-buffered, bf16)
                  + H * H * 2 + H * 4            # W_dense + b_dense (1 buffer)
                  + H * lp * 2 + lp * 4          # W_out + b_out   (1 buffer)
                  + 2 * tm * lp * 4)             # out tile (double-buffered)
        vmem_limit = min(max(needed + 8 * mib, 32 * mib), cap - 4 * mib)
        out = pl.pallas_call(
            _fused_kernel,
            out_shape=jax.ShapeDtypeStruct((n_pad, lp), jnp.float32),
            grid_spec=pltpu.PrefetchScalarGridSpec(
                num_scalar_prefetch=0,
                grid=(n_pad // tm,),
                in_specs=[
                    pl.BlockSpec((tm, H), lambda i: (i, 0)),      # x (streamed)
                    # Grid-invariant operands: single-buffer to save VMEM/DMA.
                    pl.BlockSpec((H, H), lambda i: (0, 0),
                                 pipeline_mode=pl.Buffered(1)),
                    pl.BlockSpec((1, H), lambda i: (0, 0),
                                 pipeline_mode=pl.Buffered(1)),
                    pl.BlockSpec((H, lp), lambda i: (0, 0),
                                 pipeline_mode=pl.Buffered(1)),
                    pl.BlockSpec((1, lp), lambda i: (0, 0),
                                 pipeline_mode=pl.Buffered(1)),
                ],
                out_specs=pl.BlockSpec((tm, lp), lambda i: (i, 0)),
            ),
            compiler_params=pltpu.CompilerParams(
                dimension_semantics=("parallel",),
                vmem_limit_bytes=vmem_limit,
            ),
        )(xf, wd, bd, wo, bo)
    else:
        # Stream W_dense / W_out in hidden-column slabs of width tk.
        tk = min(k_tile, _round_up(H, LANE))
        h_pad = _round_up(H, tk)
        if h_pad != H:       # zero-pad the intermediate hidden dim (benign)
            wd = jnp.pad(wd, ((0, 0), (0, h_pad - H)))
            bd = jnp.pad(bd, ((0, 0), (0, h_pad - H)))
            wo = jnp.pad(wo, ((0, h_pad - H), (0, 0)))
        needed = (2 * tm * H * 2
                  + 2 * H * tk * 2 + 2 * tk * 4
                  + 2 * tk * lp * 2 + lp * 4
                  + 2 * tm * lp * 4
                  + tm * lp * 4)                 # f32 accumulator scratch
        vmem_limit = min(max(needed + 8 * mib, 32 * mib), cap - 4 * mib)
        out = pl.pallas_call(
            _ktiled_kernel,
            out_shape=jax.ShapeDtypeStruct((n_pad, lp), jnp.float32),
            grid_spec=pltpu.PrefetchScalarGridSpec(
                num_scalar_prefetch=0,
                grid=(n_pad // tm, h_pad // tk),
                in_specs=[
                    pl.BlockSpec((tm, H), lambda i, j: (i, 0)),   # x rows
                    pl.BlockSpec((H, tk), lambda i, j: (0, j)),   # Wd slab
                    pl.BlockSpec((1, tk), lambda i, j: (0, j)),   # bd slab
                    pl.BlockSpec((tk, lp), lambda i, j: (j, 0)),  # Wo slab
                    pl.BlockSpec((1, lp), lambda i, j: (0, 0),
                                 pipeline_mode=pl.Buffered(1)),   # bo
                ],
                out_specs=pl.BlockSpec((tm, lp), lambda i, j: (i, 0)),
                scratch_shapes=[pltpu.VMEM((tm, lp), jnp.float32)],
            ),
            compiler_params=pltpu.CompilerParams(
                dimension_semantics=("parallel", "arbitrary"),
                vmem_limit_bytes=vmem_limit,
            ),
        )(xf, wd, bd, wo, bo)

    return out[:n, :L].reshape(*lead, L)


# ---------------------------------------------------------------------------
# Parameter init (PyTorch nn.Linear default: uniform(-1/sqrt(fan_in), +...)).
# Weights stored pre-transposed as (in_features, out_features), f32 master.
# ---------------------------------------------------------------------------
def init_params(key, hidden_size, num_labels):
    H, L = hidden_size, num_labels
    k = 1.0 / jnp.sqrt(H)
    keys = jax.random.split(key, 4)
    u = lambda kk, shape, s: jax.random.uniform(kk, shape, jnp.float32, -s, s)
    return {
        "w_dense": u(keys[0], (H, H), k),
        "b_dense": u(keys[1], (H,), k),
        "w_out": u(keys[2], (H, L), k),
        "b_out": u(keys[3], (L,), k),
    }


def _reference_forward(x, params):
    """Pure-JAX f32 reference of the eval-mode ClassifierHead forward."""
    h = jnp.tanh(x @ params["w_dense"] + params["b_dense"])
    return h @ params["w_out"] + params["b_out"]


if __name__ == "__main__":
    key = jax.random.PRNGKey(0)
    k_x, k_p, k_x2, k_p2 = jax.random.split(key, 4)

    # Small shapes consistent with the module: (batch, seq, hidden) -> labels.
    B, T, H, L = 2, 8, 32, 2
    x = jax.random.normal(k_x, (B, T, H), dtype=jnp.float32)
    params = init_params(k_p, hidden_size=H, num_labels=L)

    logits = jax.block_until_ready(classifier_head_forward(x, params))
    assert logits.shape == (B, T, L)
    assert bool(jnp.all(jnp.isfinite(logits)))
    ref = _reference_forward(x, params)
    assert jnp.allclose(logits, ref, atol=5e-2, rtol=5e-2), \
        float(jnp.max(jnp.abs(logits - ref)))

    # Also exercise the K-tiled (streamed-weight) path used for large H on v7x.
    H2 = 256
    x2 = jax.random.normal(k_x2, (B, T, H2), dtype=jnp.float32)
    params2 = init_params(k_p2, hidden_size=H2, num_labels=L)
    logits2 = jax.block_until_ready(
        classifier_head_forward(x2, params2, force_ktiled=True, k_tile=128))
    assert logits2.shape == (B, T, L)
    assert bool(jnp.all(jnp.isfinite(logits2)))
    ref2 = _reference_forward(x2, params2)
    assert jnp.allclose(logits2, ref2, atol=5e-2, rtol=5e-2), \
        float(jnp.max(jnp.abs(logits2 - ref2)))

    print("KERNEL_OK")
</pallas_src>

<mosaic_0001>
module attributes {stable_mosaic.version = 11 : i64} {
  func.func @_fused_kernel(%arg0: i32, %arg1: memref<16x32xbf16, #tpu.memory_space<vmem>>, %arg2: memref<32x32xbf16, #tpu.memory_space<vmem>>, %arg3: memref<1x32xf32, #tpu.memory_space<vmem>>, %arg4: memref<32x128xbf16, #tpu.memory_space<vmem>>, %arg5: memref<1x128xf32, #tpu.memory_space<vmem>>, %arg6: memref<16x128xf32, #tpu.memory_space<vmem>>) attributes {dimension_semantics = [#tpu.dimension_semantics<parallel>], iteration_bounds = array<i64: 1>, scalar_prefetch = 0 : i64, scratch_operands = 0 : i64, tpu.core_type = #tpu.core_type<tc>, window_params = [{transform_indices = @transform_0, window_bounds = array<i64: 16, 32>}, {pipeline_mode = #tpu.pipeline_mode<synchronous>, transform_indices = @transform_1, window_bounds = array<i64: 32, 32>}, {pipeline_mode = #tpu.pipeline_mode<synchronous>, transform_indices = @transform_2, window_bounds = array<i64: 1, 32>}, {pipeline_mode = #tpu.pipeline_mode<synchronous>, transform_indices = @transform_3, window_bounds = array<i64: 32, 128>}, {pipeline_mode = #tpu.pipeline_mode<synchronous>, transform_indices = @transform_4, window_bounds = array<i64: 1, 128>}, {transform_indices = @transform_5, window_bounds = array<i64: 16, 128>}]} {
    %c0 = arith.constant 0 : index
    %c0_0 = arith.constant 0 : index
    %0 = vector.load %arg1[%c0, %c0_0] : memref<16x32xbf16, #tpu.memory_space<vmem>>, vector<16x32xbf16>
    %c0_1 = arith.constant 0 : index
    %c0_2 = arith.constant 0 : index
    %1 = vector.load %arg2[%c0_1, %c0_2] : memref<32x32xbf16, #tpu.memory_space<vmem>>, vector<32x32xbf16>
    %cst = arith.constant dense<0.000000e+00> : vector<16x32xf32>
    %2 = tpu.matmul %0, %1, %cst {dimension_numbers = #tpu.dot_dimension_numbers<[1], [0], [0], [1], [0, 0, 1, 1], [], []>} : vector<16x32xbf16>, vector<32x32xbf16>, vector<16x32xf32> -> vector<16x32xf32>
    %c0_3 = arith.constant 0 : index
    %c0_4 = arith.constant 0 : index
    %3 = vector.load %arg3[%c0_3, %c0_4] : memref<1x32xf32, #tpu.memory_space<vmem>>, vector<1x32xf32>
    %4 = vector.broadcast %3 : vector<1x32xf32> to vector<16x32xf32>
    %5 = arith.addf %2, %4 : vector<16x32xf32>
    %6 = math.tanh %5 : vector<16x32xf32>
    %7 = arith.truncf %6 : vector<16x32xf32> to vector<16x32xbf16>
    %c0_5 = arith.constant 0 : index
    %c0_6 = arith.constant 0 : index
    %8 = vector.load %arg4[%c0_5, %c0_6] : memref<32x128xbf16, #tpu.memory_space<vmem>>, vector<32x128xbf16>
    %cst_7 = arith.constant dense<0.000000e+00> : vector<16x128xf32>
    %9 = tpu.matmul %7, %8, %cst_7 {dimension_numbers = #tpu.dot_dimension_numbers<[1], [0], [0], [1], [0, 0, 1, 1], [], []>} : vector<16x32xbf16>, vector<32x128xbf16>, vector<16x128xf32> -> vector<16x128xf32>
    %c0_8 = arith.constant 0 : index
    %c0_9 = arith.constant 0 : index
    %10 = vector.load %arg5[%c0_8, %c0_9] : memref<1x128xf32, #tpu.memory_space<vmem>>, vector<1x128xf32>
    %11 = vector.broadcast %10 : vector<1x128xf32> to vector<16x128xf32>
    %12 = arith.addf %9, %11 : vector<16x128xf32>
    %c0_10 = arith.constant 0 : index
    %c0_11 = arith.constant 0 : index
    %13 = vector.load %arg6[%c0_10, %c0_11] : memref<16x128xf32, #tpu.memory_space<vmem>>, vector<16x128xf32>
    tpu.vector_store %arg6[%c0_10, %c0_11], %12 {strides = array<i32>} : memref<16x128xf32, #tpu.memory_space<vmem>>, vector<16x128xf32>,
    return
  }
  func.func @transform_0(%arg0: i32) -> (i32, i32) {
    %c0_i32 = arith.constant 0 : i32
    %c0_i32_0 = arith.constant 0 : i32
    return %arg0, %c0_i32 : i32, i32
  }
  func.func @transform_1(%arg0: i32) -> (i32, i32) {
    %c0_i32 = arith.constant 0 : i32
    %c0_i32_0 = arith.constant 0 : i32
    %c0_i32_1 = arith.constant 0 : i32
    return %c0_i32, %c0_i32_0 : i32, i32
  }
  func.func @transform_2(%arg0: i32) -> (i32, i32) {
    %c0_i32 = arith.constant 0 : i32
    %c0_i32_0 = arith.constant 0 : i32
    %c0_i32_1 = arith.constant 0 : i32
    return %c0_i32, %c0_i32_0 : i32, i32
  }
  func.func @transform_3(%arg0: i32) -> (i32, i32) {
    %c0_i32 = arith.constant 0 : i32
    %c0_i32_0 = arith.constant 0 : i32
    %c0_i32_1 = arith.constant 0 : i32
    return %c0_i32, %c0_i32_0 : i32, i32
  }
  func.func @transform_4(%arg0: i32) -> (i32, i32) {
    %c0_i32 = arith.constant 0 : i32
    %c0_i32_0 = arith.constant 0 : i32
    %c0_i32_1 = arith.constant 0 : i32
    return %c0_i32, %c0_i32_0 : i32, i32
  }
  func.func @transform_5(%arg0: i32) -> (i32, i32) {
    %c0_i32 = arith.constant 0 : i32
    %c0_i32_0 = arith.constant 0 : i32
    return %arg0, %c0_i32 : i32, i32
  }
}

</mosaic_0001>

<llo_original>
// kernel: tpu_custom_call.1
$region0: #{tpu_custom_call.1}
  #allocation0 [shape = 'u32[]', space=smem, size = 0x4, offset = 0x4, fixed_abs, tag = 'smem constant byte address 0x4 - core index']
  #allocation1 [shape = 'u32[144,128]{1,0:T(1,128)}', space=vmem, size = 0x12000, scoped, tag = 'internal scratch']
  %s0 = inlined_call_operand.hbm [shape: bf16[16,32], index: 0, kind: input, shape index: {}]
  %s1 = inlined_call_operand.hbm [shape: bf16[32,32], index: 1, kind: input, shape index: {}]
  %s2 = inlined_call_operand.vmem [shape: f32[1,32], index: 2, kind: input, shape index: {}]
  %s3 = inlined_call_operand.hbm [shape: bf16[32,128], index: 3, kind: input, shape index: {}]
  %s4 = inlined_call_operand.vmem [shape: f32[1,128], index: 4, kind: input, shape index: {}]
  %s5 = inlined_call_operand.hbm [shape: f32[16,128], index: 5, kind: output, shape index: {}]
  %s6 = sld [smem:[#allocation0]]
  $region42: #{tpu_custom_call.1} parent=0
    _
  %s8 = ssub.s32 1, %s6
  %s9 = scalar_select 0, %s8, %s6
  $region1: #{tpu_custom_call.1} parent=0
    #allocation2 [shape = 'u8[4096]{0}', space=vmem, size = 0x1000, scoped, tag = 'input window, operand 0, single buffered']
    #allocation3 [shape = 's32[1]{0}', space=sflag, size = 0x4, scoped, tag = 'scoped memory for tpu_custom_call.1']
    #allocation4 [shape = 's32[1]{0}', space=sflag, size = 0x4, scoped, tag = 'scoped memory for tpu_custom_call.1']
    #allocation5 [shape = 'u8[8192]{0}', space=vmem, size = 0x2000, scoped, tag = 'input window, operand 1, single buffered']
    #allocation6 [shape = 's32[1]{0}', space=sflag, size = 0x4, scoped, tag = 'scoped memory for tpu_custom_call.1']
    #allocation7 [shape = 'u8[8192]{0}', space=vmem, size = 0x2000, scoped, tag = 'input window, operand 3, single buffered']
    #allocation8 [shape = 'u8[8192]{0}', space=vmem, size = 0x2000, scoped, tag = 'output window, operand 0, single buffered']
    %10 = vsyncpa [#allocation3], 0
    %11 = vsyncpa [#allocation6], 0
    %12 = vsyncpa [#allocation4], 0
    // Predicated region
    $region2: #{tpu_custom_call.1} parent=1 // pred_check
      _
    $region3: #{tpu_custom_call.1} parent=1 // pred_check_branch
      %14 = sbr.rel (0) target = $region5
    $region4: #{tpu_custom_call.1} parent=1 // pred_region
      %s16 = ssub.s32 128, 128
      %17 = vsyncadd [#allocation3], %s16
      %s18 = sshll.u32 [#allocation2], 4
      %s19 = int_to_ptr.vmem [resolvable:$true] %s18
      %24 = dma.hbm_to_vmem [thread:$0]  %s0, 128, %s19, [#allocation3], 64, 64, 4
    $region5: #{tpu_custom_call.1} parent=1 // pred_fallthru
      _
    // Predicated region
    $region6: #{tpu_custom_call.1} parent=1 // pred_check
      _
    $region7: #{tpu_custom_call.1} parent=1 // pred_check_branch
      %26 = sbr.rel (0) target = $region9
    $region8: #{tpu_custom_call.1} parent=1 // pred_region
      %s28 = ssub.s32 256, 256
      %29 = vsyncadd [#allocation6], %s28
      %s30 = sshll.u32 [#allocation5], 4
      %s31 = int_to_ptr.vmem [resolvable:$true] %s30
      %36 = dma.hbm_to_vmem [thread:$0]  %s1, 256, %s31, [#allocation6], 64, 64, 4
    $region9: #{tpu_custom_call.1} parent=1 // pred_fallthru
      _
    // Predicated region
    $region10: #{tpu_custom_call.1} parent=1 // pred_check
      _
    $region11: #{tpu_custom_call.1} parent=1 // pred_check_branch
      %38 = sbr.rel (0) target = $region13
    $region12: #{tpu_custom_call.1} parent=1 // pred_region
      _
    $region13: #{tpu_custom_call.1} parent=1 // pred_fallthru
      _
    // Predicated region
    $region14: #{tpu_custom_call.1} parent=1 // pred_check
      _
    $region15: #{tpu_custom_call.1} parent=1 // pred_check_branch
      %40 = sbr.rel (0) target = $region17
    $region16: #{tpu_custom_call.1} parent=1 // pred_region
      %s42 = ssub.s32 256, 256
      %43 = vsyncadd [#allocation6], %s42
      %s44 = sshll.u32 [#allocation7], 4
      %s45 = int_to_ptr.vmem [resolvable:$true] %s44
      %50 = dma.hbm_to_vmem [thread:$0]  %s3, 256, %s45, [#allocation6], 64, 64, 4
    $region17: #{tpu_custom_call.1} parent=1 // pred_fallthru
      _
    // Predicated region
    $region18: #{tpu_custom_call.1} parent=1 // pred_check
      _
    $region19: #{tpu_custom_call.1} parent=1 // pred_check_branch
      %52 = sbr.rel (0) target = $region21
    $region20: #{tpu_custom_call.1} parent=1 // pred_region
      _
    $region21: #{tpu_custom_call.1} parent=1 // pred_fallthru
      _
    // Predicated region
    $region22: #{tpu_custom_call.1} parent=1 // pred_check
      _
    $region23: #{tpu_custom_call.1} parent=1 // pred_check_branch
      %54 = sbr.rel (0) target = $region25
    $region24: #{tpu_custom_call.1} parent=1 // pred_region
      %55 = dma.done [#allocation3], 128
    $region25: #{tpu_custom_call.1} parent=1 // pred_fallthru
      _
    // Predicated region
    $region26: #{tpu_custom_call.1} parent=1 // pred_check
      _
    $region27: #{tpu_custom_call.1} parent=1 // pred_check_branch
      %57 = sbr.rel (0) target = $region29
    $region28: #{tpu_custom_call.1} parent=1 // pred_region
      %58 = dma.done [#allocation6], 256
    $region29: #{tpu_custom_call.1} parent=1 // pred_fallthru
      _
    // Predicated region
    $region30: #{tpu_custom_call.1} parent=1 // pred_check
      _
    $region31: #{tpu_custom_call.1} parent=1 // pred_check_branch
      %60 = sbr.rel (0) target = $region33
    $region32: #{tpu_custom_call.1} parent=1 // pred_region
      %61 = dma.done [#allocation6], 256
    $region33: #{tpu_custom_call.1} parent=1 // pred_fallthru
      _
    %v63 = vld [vmem:[#allocation2] sm:$0xf]
    %v64 = vld [vmem:[#allocation2 + $0x4] sm:$0xf]
    %v65 = vld [vmem:[#allocation5] sm:$0xf]
    %v66 = vld [vmem:[#allocation5 + $0x4] sm:$0xf]
    %v67 = vld [vmem:[#allocation5 + $0x8] sm:$0xf]
    %v68 = vld [vmem:[#allocation5 + $0xc] sm:$0xf]
    %v69 = vld [vmem:[%s2] sm:$0x1]
    %v71 = vlaneseq
    %v72 = vshrl.u32 %v71, 7
    %v73 = vsub.s32 0, %v72
    %v74 = vrot.slane %v69, %v73
    %v78 = vunpack.c.l.b16 %v63
    %v79 = vunpack.c.l.b16 %v64
    %v80 = vpack.c.b16 %v79, %v78
    %v85 = vunpack.c.l.b16 %v65
    %v86 = vunpack.c.l.b16 %v66
    %v87 = vunpack.c.l.b16 %v67
    %v88 = vunpack.c.l.b16 %v68
    %v89 = vpack.c.b16 %v86, %v85
    %v90 = vpack.c.b16 %v88, %v87
    %vm93 = vcmask 261120
    %v95 = vsel %vm93, %v80, 0
    %97 = vmatprep.subr.bf16.mxu0 0
    %98 = vmatpush1.bf16.msra.mxu0 %v89
    %99 = vmatprep.subr.bf16.mxu0 0
    %100 = vmatpush1.bf16.msra.mxu0 %v90
    %101 = vmatprep.subr.bf16.mxu0 0
    %102 = vmatpush1.bf16.msra.mxu0 0
    %103 = vmatprep.subr.bf16.mxu0 0
    %104 = vmatpush1.bf16.msra.mxu0 0
    %105 = vmatprep.subr.bf16.mxu0 0
    %106 = vmatpush1.bf16.msra.mxu0 0
    %107 = vmatprep.subr.bf16.mxu0 0
    %108 = vmatpush1.bf16.msra.mxu0 0
    %109 = vmatprep.subr.bf16.mxu0 0
    %110 = vmatpush1.bf16.msra.mxu0 0
    %111 = vmatprep.subr.bf16.mxu0 0
    %112 = vmatpush1.bf16.msra.mxu0 0
    %113 = vmatprep.subr.bf16.mxu0 0
    %114 = vmatpush1.bf16.msra.mxu0 0
    %115 = vmatprep.subr.bf16.mxu0 0
    %116 = vmatpush1.bf16.msra.mxu0 0
    %117 = vmatprep.subr.bf16.mxu0 0
    %118 = vmatpush1.bf16.msra.mxu0 0
    %119 = vmatprep.subr.bf16.mxu0 0
    %120 = vmatpush1.bf16.msra.mxu0 0
    %121 = vmatprep.subr.bf16.mxu0 0
    %122 = vmatpush1.bf16.msra.mxu0 0
    %123 = vmatprep.subr.bf16.mxu0 0
    %124 = vmatpush1.bf16.msra.mxu0 0
    %125 = vmatprep.subr.bf16.mxu0 0
    %126 = vmatpush1.bf16.msra.mxu0 0
    %127 = vmatprep.subr.bf16.mxu0 0
    %128 = vmatpush1.bf16.msra.mxu0 0
    %129 = vmatprep.mubr.bf16.mxu0 0
    %130 = vmatmul.mubr.bf16.gmra.mrb[0].mxu0 %v95
    %v131 = vpop.f32.mrb[0].mxu0
    %v132 = vadd.f32 %v74, %v131
    %v133 = vpop.f32.mrb[0].mxu0
    %v134 = vpop.f32.mrb[0].mxu0
    %v135 = vadd.f32 %v74, %v134
    %v136 = vpop.f32.mrb[0].mxu0
    %137 = vdwg.mxu0
    %v138 = vtanh.pop %v132
    %v139 = vtanh.pop %v135
    %v140 = vpack.c.bf16 %v139, %v138
    %v141 = vld [vmem:[#allocation7] sm:$0xf]
    %v142 = vld [vmem:[#allocation7 + $0x4] sm:$0xf]
    %v143 = vld [vmem:[#allocation7 + $0x8] sm:$0xf]
    %v144 = vld [vmem:[#allocation7 + $0xc] sm:$0xf]
    %v145 = vld [vmem:[%s4] sm:$0x1]
    %v147 = vlaneseq
    %v148 = vshrl.u32 %v147, 7
    %v149 = vsub.s32 0, %v148
    %v150 = vrot.slane %v145, %v149
    %v156 = vunpack.c.l.b16 %v141
    %v157 = vunpack.c.l.b16 %v142
    %v158 = vunpack.c.l.b16 %v143
    %v159 = vunpack.c.l.b16 %v144
    %v160 = vpack.c.b16 %v157, %v156
    %v161 = vpack.c.b16 %v159, %v158
    %v165 = vsel %vm93, %v140, 0
    %167 = vmatprep.subr.bf16.mxu0 0
    %168 = vmatpush1.bf16.msra.mxu0 %v160
    %169 = vmatprep.subr.bf16.mxu0 0
    %170 = vmatpush1.bf16.msra.mxu0 %v161
    %171 = vmatprep.subr.bf16.mxu0 0
    %172 = vmatpush1.bf16.msra.mxu0 0
    %173 = vmatprep.subr.bf16.mxu0 0
    %174 = vmatpush1.bf16.msra.mxu0 0
    %175 = vmatprep.subr.bf16.mxu0 0
    %176 = vmatpush1.bf16.msra.mxu0 0
    %177 = vmatprep.subr.bf16.mxu0 0
    %178 = vmatpush1.bf16.msra.mxu0 0
    %179 = vmatprep.subr.bf16.mxu0 0
    %180 = vmatpush1.bf16.msra.mxu0 0
    %181 = vmatprep.subr.bf16.mxu0 0
    %182 = vmatpush1.bf16.msra.mxu0 0
    %183 = vmatprep.subr.bf16.mxu0 0
    %184 = vmatpush1.bf16.msra.mxu0 0
    %185 = vmatprep.subr.bf16.mxu0 0
    %186 = vmatpush1.bf16.msra.mxu0 0
    %187 = vmatprep.subr.bf16.mxu0 0
    %188 = vmatpush1.bf16.msra.mxu0 0
    %189 = vmatprep.subr.bf16.mxu0 0
    %190 = vmatpush1.bf16.msra.mxu0 0
    %191 = vmatprep.subr.bf16.mxu0 0
    %192 = vmatpush1.bf16.msra.mxu0 0
    %193 = vmatprep.subr.bf16.mxu0 0
    %194 = vmatpush1.bf16.msra.mxu0 0
    %195 = vmatprep.subr.bf16.mxu0 0
    %196 = vmatpush1.bf16.msra.mxu0 0
    %197 = vmatprep.subr.bf16.mxu0 0
    %198 = vmatpush1.bf16.msra.mxu0 0
    %199 = vmatprep.mubr.bf16.mxu0 0
    %200 = vmatmul.mubr.bf16.gmra.mrb[0].mxu0 %v165
    %v201 = vpop.f32.mrb[0].mxu0
    %v202 = vadd.f32 %v150, %v201
    %v203 = vpop.f32.mrb[0].mxu0
    %v204 = vpop.f32.mrb[0].mxu0
    %v205 = vadd.f32 %v150, %v204
    %v206 = vpop.f32.mrb[0].mxu0
    %207 = vdwg.mxu0
    %208 = vst [vmem:[#allocation8] sm:$0xff] %v202
    %209 = vst [vmem:[#allocation8 + $0x8] sm:$0xff] %v205
    // Predicated region
    $region34: #{tpu_custom_call.1} parent=1 // pred_check
      _
    $region35: #{tpu_custom_call.1} parent=1 // pred_check_branch
      %211 = sbr.rel (0) target = $region37
    $region36: #{tpu_custom_call.1} parent=1 // pred_region
      %s213 = ssub.s32 256, 256
      %214 = vsyncadd [#allocation4], %s213
      %s215 = sshll.u32 [#allocation8], 4
      %s216 = int_to_ptr.vmem [resolvable:$true] %s215
      %221 = dma.vmem_to_hbm [thread:$0]  %s216, 256, %s5, [#allocation4], 128, 128, 8
    $region37: #{tpu_custom_call.1} parent=1 // pred_fallthru
      _
    // Predicated region
    $region38: #{tpu_custom_call.1} parent=1 // pred_check
      _
    $region39: #{tpu_custom_call.1} parent=1 // pred_check_branch
      %223 = sbr.rel (0) target = $region41
    $region40: #{tpu_custom_call.1} parent=1 // pred_region
      %224 = dma.done [#allocation4], 256
    $region41: #{tpu_custom_call.1} parent=1 // pred_fallthru
      _
    %225 = vsyncpa [#allocation3], 1
    %226 = vsyncpa [#allocation6], 1
    %227 = vsyncpa [#allocation4], 1

</llo_original>
